<compile_context>
chip_gen: v7x
topology: tpu7x:2x2x1
jax: 0.10.0
libtpu: 0.0.40
codegen_flags: <defaults>
</compile_context>

<pallas_src>
import math

import jax
import jax.numpy as jnp
from jax import lax
from jax.experimental import pallas as pl
from jax.experimental.pallas import tpu as pltpu  # noqa: F401  (TPU backend import)

# ----------------------------- configuration --------------------------------
N = 256                 # number of nodes
C = 32                  # channel multiplicity of irreps_in ("Cx0e + Cx1o")
DIN = 4 * C             # dim(irreps_in) = C * (1 + 3) = 128
H = 16                  # MLP_irreps = "Hx0e"


# ------------------------------- kernel -------------------------------------
def _readout_kernel(x_ref, w1_ref, w2_ref, o_ref):
    # linear_1: contract over the full feature axis DIN.  The 1o block of x hits
    # zero columns of w1 (o3.Linear has no 1o->0e path), so the slice+transpose
    # that used to live in the wrapper is now just MXU operand staging (or at
    # worst one 256x128 XLU transpose riding a free slot).
    h = lax.dot_general(
        w1_ref[...], x_ref[...],
        dimension_numbers=(((1,), (1,)), ((), ())),      # (H, DIN) · (N, DIN)^T
        preferred_element_type=jnp.float32,
    )                                                    # (H, N), nodes on lanes
    # gate: SiLU on even scalars (normalize2mom constant is folded into w2).
    # TODO(synk): gate is fixed to SiLU (MACE default); other `gate` callables would
    # need their own normalize2mom constant folded the same way.
    a = jax.nn.silu(h)
    # linear_2: (1, H) @ (H, N) -> (1, N), unmasked lane-dense store.
    o_ref[...] = jnp.dot(w2_ref[...], a, preferred_element_type=jnp.float32)


# ------------------------------- wrapper -------------------------------------
def nonlinear_readout_block(x, w1t, w2t):
    """x: (N, DIN) in e3nn irreps layout [Cx0e | Cx1o]; returns (N, 1) "0e" output."""
    n, din = x.shape
    h = w1t.shape[0]
    # Single invocation, full-array blocks resident in VMEM (no grid, no per-step
    # overhead).  All arrays are tiny (<100 KB total scratch) on every generation.
    out_t = pl.pallas_call(
        _readout_kernel,
        out_shape=jax.ShapeDtypeStruct((1, n), jnp.float32),
        cost_estimate=pl.CostEstimate(
            flops=2 * n * din * h + 2 * n * h,
            transcendentals=n * h,
            bytes_accessed=4 * (n * din + h * din + h + n),
        ),
    )(x, w1t, w2t)
    # (1, N) -> (N, 1) keeps the e3nn output layout; same row-major data order,
    # so this is a free metadata reshape, not a transpose HLO.
    return out_t.reshape(n, 1)


# --------------------------- parameter creation ------------------------------
def init_params(key):
    k1, k2, kz = jax.random.split(key, 3)
    W1 = jax.random.normal(k1, (C, H), dtype=jnp.float32)   # 0e->0e path of linear_1
    W2 = jax.random.normal(k2, (H, 1), dtype=jnp.float32)   # "Hx0e" -> "0e" (linear_2)
    # e3nn nn.Activation wraps the gate with normalize2mom: scale so E[act(z)^2] = 1
    # for z ~ N(0,1).  Measured deterministically here (mirrors e3nn's sampled const).
    z = jax.random.normal(kz, (1 << 20,), dtype=jnp.float32)
    c_act = 1.0 / jnp.sqrt(jnp.mean(jnp.square(jax.nn.silu(z))))

    # Kernel-side constants: path norms (1/sqrt(fan_in)) and the activation norm are
    # folded into the weights; linear_1's weight is laid out as (H, DIN) with zeros
    # in the 1o columns so the kernel contracts over the untouched input array.
    w1t = jnp.zeros((H, DIN), jnp.float32).at[:, :C].set(W1.T / math.sqrt(C))
    w2t = (W2 * c_act / math.sqrt(H)).T                      # (1, H)
    raw = dict(W1=W1, W2=W2, c_act=c_act)
    return raw, (w1t, w2t)


# ---------------------------- pure-JAX reference -----------------------------
def reference(x, raw):
    h = (x[:, :C] @ raw["W1"]) / math.sqrt(C)         # linear_1 (only 0e->0e path)
    a = jax.nn.silu(h) * raw["c_act"]                 # Activation(SiLU) w/ normalize2mom
    return (a @ raw["W2"]) / math.sqrt(H)             # linear_2 -> "0e"


# --------------------------------- main --------------------------------------
if __name__ == "__main__":
    key = jax.random.PRNGKey(0)
    k_x, k_par = jax.random.split(key)

    x = jax.random.normal(k_x, (N, DIN), dtype=jnp.float32)
    raw, consts = init_params(k_par)

    run = jax.jit(lambda xx: nonlinear_readout_block(xx, *consts))
    out = jax.block_until_ready(run(x))

    ref = reference(x, raw)
    assert out.shape == (N, 1) and out.dtype == jnp.float32
    err = float(jnp.max(jnp.abs(out - ref)))
    assert bool(jnp.allclose(out, ref, rtol=1e-4, atol=1e-4)), err
    print("KERNEL_OK")
</pallas_src>

<mosaic_0001>
module attributes {stable_mosaic.version = 11 : i64} {
  func.func @_readout_kernel(%arg0: memref<256x128xf32, #tpu.memory_space<vmem>>, %arg1: memref<16x128xf32, #tpu.memory_space<vmem>>, %arg2: memref<1x16xf32, #tpu.memory_space<vmem>>, %arg3: memref<1x256xf32, #tpu.memory_space<vmem>>) attributes {dimension_semantics = [], scalar_prefetch = 0 : i64, scratch_operands = 0 : i64, tpu.core_type = #tpu.core_type<tc>} {
    %c0 = arith.constant 0 : index
    %c0_0 = arith.constant 0 : index
    %0 = vector.load %arg1[%c0, %c0_0] : memref<16x128xf32, #tpu.memory_space<vmem>>, vector<16x128xf32>
    %c0_1 = arith.constant 0 : index
    %c0_2 = arith.constant 0 : index
    %1 = vector.load %arg0[%c0_1, %c0_2] : memref<256x128xf32, #tpu.memory_space<vmem>>, vector<256x128xf32>
    %cst = arith.constant dense<0.000000e+00> : vector<16x256xf32>
    %2 = tpu.matmul %0, %1, %cst {dimension_numbers = #tpu.dot_dimension_numbers<[1], [1], [0], [0], [0, 0, 1, 0], [], []>} : vector<16x128xf32>, vector<256x128xf32>, vector<16x256xf32> -> vector<16x256xf32>
    %3 = arith.negf %2 : vector<16x256xf32>
    %4 = math.exp %3 : vector<16x256xf32>
    %cst_3 = arith.constant 1.000000e+00 : f32
    %5 = vector.broadcast %cst_3 : f32 to vector<16x256xf32>
    %6 = arith.addf %5, %4 : vector<16x256xf32>
    %7 = arith.divf %5, %6 : vector<16x256xf32>
    %8 = arith.mulf %2, %7 : vector<16x256xf32>
    %c0_4 = arith.constant 0 : index
    %c0_5 = arith.constant 0 : index
    %9 = vector.load %arg2[%c0_4, %c0_5] : memref<1x16xf32, #tpu.memory_space<vmem>>, vector<1x16xf32>
    %cst_6 = arith.constant dense<0.000000e+00> : vector<1x256xf32>
    %10 = tpu.matmul %9, %8, %cst_6 {dimension_numbers = #tpu.dot_dimension_numbers<[1], [0], [0], [1], [0, 0, 1, 1], [], []>} : vector<1x16xf32>, vector<16x256xf32>, vector<1x256xf32> -> vector<1x256xf32>
    %c0_7 = arith.constant 0 : index
    %c0_8 = arith.constant 0 : index
    %11 = vector.load %arg3[%c0_7, %c0_8] : memref<1x256xf32, #tpu.memory_space<vmem>>, vector<1x256xf32>
    tpu.vector_store %arg3[%c0_7, %c0_8], %10 {strides = array<i32>} : memref<1x256xf32, #tpu.memory_space<vmem>>, vector<1x256xf32>,
    return
  }
}

</mosaic_0001>

<llo_original>
// kernel: _lambda_.1
$region0: #{_lambda_.1}
  #allocation0 [shape = 'u32[]', space=smem, size = 0x4, offset = 0x4, fixed_abs, tag = 'smem constant byte address 0x4 - core index']
  #allocation1 [shape = 'u32[144,128]{1,0:T(1,128)}', space=vmem, size = 0x12000, scoped, tag = 'internal scratch']
  %s0 = inlined_call_operand.hbm [shape: f32[256,128], index: 0, kind: input, shape index: {}]
  %s1 = inlined_call_operand.hbm [shape: f32[16,128], index: 1, kind: input, shape index: {}]
  %s2 = inlined_call_operand.vmem [shape: f32[1,16], index: 2, kind: input, shape index: {}]
  %s3 = inlined_call_operand.hbm [shape: f32[1,256], index: 3, kind: output, shape index: {}]
  %s4 = sld [smem:[#allocation0]]
  $region30: #{_lambda_.1} parent=0
    _
  %s6 = ssub.s32 1, %s4
  %s7 = scalar_select 0, %s6, %s4
  $region1: #{_lambda_.1} parent=0
    #allocation2 [shape = 'u8[131072]{0}', space=vmem, size = 0x20000, scoped, tag = 'input window, operand 0, single buffered']
    #allocation3 [shape = 's32[1]{0}', space=sflag, size = 0x4, scoped, tag = 'scoped memory for _lambda_.1']
    #allocation4 [shape = 's32[1]{0}', space=sflag, size = 0x4, scoped, tag = 'scoped memory for _lambda_.1']
    #allocation5 [shape = 'u8[8192]{0}', space=vmem, size = 0x2000, scoped, tag = 'input window, operand 1, single buffered']
    #allocation6 [shape = 's32[1]{0}', space=sflag, size = 0x4, scoped, tag = 'scoped memory for _lambda_.1']
    #allocation7 [shape = 'u8[1024]{0}', space=vmem, size = 0x400, scoped, tag = 'output window, operand 0, single buffered']
    %8 = vsyncpa [#allocation3], 0
    %9 = vsyncpa [#allocation6], 0
    %10 = vsyncpa [#allocation4], 0
    // Predicated region
    $region2: #{_lambda_.1} parent=1 // pred_check
      _
    $region3: #{_lambda_.1} parent=1 // pred_check_branch
      %12 = sbr.rel (0) target = $region5
    $region4: #{_lambda_.1} parent=1 // pred_region
      %s14 = ssub.s32 4096, 4096
      %15 = vsyncadd [#allocation3], %s14
      %s16 = sshll.u32 [#allocation2], 4
      %s17 = int_to_ptr.vmem [resolvable:$true] %s16
      %22 = dma.hbm_to_vmem [thread:$0]  %s0, 4096, %s17, [#allocation3], 128, 128, 8
    $region5: #{_lambda_.1} parent=1 // pred_fallthru
      _
    // Predicated region
    $region6: #{_lambda_.1} parent=1 // pred_check
      _
    $region7: #{_lambda_.1} parent=1 // pred_check_branch
      %24 = sbr.rel (0) target = $region9
    $region8: #{_lambda_.1} parent=1 // pred_region
      %s26 = ssub.s32 256, 256
      %27 = vsyncadd [#allocation6], %s26
      %s28 = sshll.u32 [#allocation5], 4
      %s29 = int_to_ptr.vmem [resolvable:$true] %s28
      %34 = dma.hbm_to_vmem [thread:$0]  %s1, 256, %s29, [#allocation6], 128, 128, 8
    $region9: #{_lambda_.1} parent=1 // pred_fallthru
      _
    // Predicated region
    $region10: #{_lambda_.1} parent=1 // pred_check
      _
    $region11: #{_lambda_.1} parent=1 // pred_check_branch
      %36 = sbr.rel (0) target = $region13
    $region12: #{_lambda_.1} parent=1 // pred_region
      _
    $region13: #{_lambda_.1} parent=1 // pred_fallthru
      _
    // Predicated region
    $region14: #{_lambda_.1} parent=1 // pred_check
      _
    $region15: #{_lambda_.1} parent=1 // pred_check_branch
      %38 = sbr.rel (0) target = $region17
    $region16: #{_lambda_.1} parent=1 // pred_region
      %39 = dma.done [#allocation3], 4096
    $region17: #{_lambda_.1} parent=1 // pred_fallthru
      _
    // Predicated region
    $region18: #{_lambda_.1} parent=1 // pred_check
      _
    $region19: #{_lambda_.1} parent=1 // pred_check_branch
      %41 = sbr.rel (0) target = $region21
    $region20: #{_lambda_.1} parent=1 // pred_region
      %42 = dma.done [#allocation6], 256
    $region21: #{_lambda_.1} parent=1 // pred_fallthru
      _
    %v43 = vld [vmem:[#allocation5] sm:$0xff]
    %v44 = vld [vmem:[#allocation5 + $0x8] sm:$0xff]
    %v45 = vld [vmem:[#allocation2] sm:$0xff]
    %v46 = vld [vmem:[#allocation2 + $0x8] sm:$0xff]
    %v47 = vld [vmem:[#allocation2 + $0x10] sm:$0xff]
    %v48 = vld [vmem:[#allocation2 + $0x18] sm:$0xff]
    %v49 = vld [vmem:[#allocation2 + $0x20] sm:$0xff]
    %v50 = vld [vmem:[#allocation2 + $0x28] sm:$0xff]
    %v51 = vld [vmem:[#allocation2 + $0x30] sm:$0xff]
    %v52 = vld [vmem:[#allocation2 + $0x38] sm:$0xff]
    %v53 = vld [vmem:[#allocation2 + $0x40] sm:$0xff]
    %v54 = vld [vmem:[#allocation2 + $0x48] sm:$0xff]
    %v55 = vld [vmem:[#allocation2 + $0x50] sm:$0xff]
    %v56 = vld [vmem:[#allocation2 + $0x58] sm:$0xff]
    %v57 = vld [vmem:[#allocation2 + $0x60] sm:$0xff]
    %v58 = vld [vmem:[#allocation2 + $0x68] sm:$0xff]
    %v59 = vld [vmem:[#allocation2 + $0x70] sm:$0xff]
    %v60 = vld [vmem:[#allocation2 + $0x78] sm:$0xff]
    %v61 = vld [vmem:[#allocation2 + $0x80] sm:$0xff]
    %v62 = vld [vmem:[#allocation2 + $0x88] sm:$0xff]
    %v63 = vld [vmem:[#allocation2 + $0x90] sm:$0xff]
    %v64 = vld [vmem:[#allocation2 + $0x98] sm:$0xff]
    %v65 = vld [vmem:[#allocation2 + $0xa0] sm:$0xff]
    %v66 = vld [vmem:[#allocation2 + $0xa8] sm:$0xff]
    %v67 = vld [vmem:[#allocation2 + $0xb0] sm:$0xff]
    %v68 = vld [vmem:[#allocation2 + $0xb8] sm:$0xff]
    %v69 = vld [vmem:[#allocation2 + $0xc0] sm:$0xff]
    %v70 = vld [vmem:[#allocation2 + $0xc8] sm:$0xff]
    %v71 = vld [vmem:[#allocation2 + $0xd0] sm:$0xff]
    %v72 = vld [vmem:[#allocation2 + $0xd8] sm:$0xff]
    %v73 = vld [vmem:[#allocation2 + $0xe0] sm:$0xff]
    %v74 = vld [vmem:[#allocation2 + $0xe8] sm:$0xff]
    %v75 = vld [vmem:[#allocation2 + $0xf0] sm:$0xff]
    %v76 = vld [vmem:[#allocation2 + $0xf8] sm:$0xff]
    %77 = vmatprep.subr.mxu0 0.0
    %78 = vmatpush1.xpose.msra.mxu0 %v45
    %79 = vmatprep.subr.mxu0 0.0
    %80 = vmatpush1.xpose.msra.mxu0 %v46
    %81 = vmatprep.subr.mxu0 0.0
    %82 = vmatpush1.xpose.msra.mxu0 %v47
    %83 = vmatprep.subr.mxu0 0.0
    %84 = vmatpush1.xpose.msra.mxu0 %v48
    %85 = vmatprep.subr.mxu0 0.0
    %86 = vmatpush1.xpose.msra.mxu0 %v49
    %87 = vmatprep.subr.mxu0 0.0
    %88 = vmatpush1.xpose.msra.mxu0 %v50
    %89 = vmatprep.subr.mxu0 0.0
    %90 = vmatpush1.xpose.msra.mxu0 %v51
    %91 = vmatprep.subr.mxu0 0.0
    %92 = vmatpush1.xpose.msra.mxu0 %v52
    %93 = vmatprep.subr.mxu0 0.0
    %94 = vmatpush1.xpose.msra.mxu0 %v53
    %95 = vmatprep.subr.mxu0 0.0
    %96 = vmatpush1.xpose.msra.mxu0 %v54
    %97 = vmatprep.subr.mxu0 0.0
    %98 = vmatpush1.xpose.msra.mxu0 %v55
    %99 = vmatprep.subr.mxu0 0.0
    %100 = vmatpush1.xpose.msra.mxu0 %v56
    %101 = vmatprep.subr.mxu0 0.0
    %102 = vmatpush1.xpose.msra.mxu0 %v57
    %103 = vmatprep.subr.mxu0 0.0
    %104 = vmatpush1.xpose.msra.mxu0 %v58
    %105 = vmatprep.subr.mxu0 0.0
    %106 = vmatpush1.xpose.msra.mxu0 %v59
    %107 = vmatprep.subr.mxu0 0.0
    %108 = vmatpush1.xpose.msra.mxu0 %v60
    %109 = vmatprep.subr.mxu0 0.0
    %110 = vmatpush1.xpose.msra.mxu0 %v61
    %111 = vmatprep.subr.mxu0 0.0
    %112 = vmatpush1.xpose.msra.mxu0 %v62
    %113 = vmatprep.subr.mxu0 0.0
    %114 = vmatpush1.xpose.msra.mxu0 %v63
    %115 = vmatprep.subr.mxu0 0.0
    %116 = vmatpush1.xpose.msra.mxu0 %v64
    %117 = vmatprep.subr.mxu0 0.0
    %118 = vmatpush1.xpose.msra.mxu0 %v65
    %119 = vmatprep.subr.mxu0 0.0
    %120 = vmatpush1.xpose.msra.mxu0 %v66
    %121 = vmatprep.subr.mxu0 0.0
    %122 = vmatpush1.xpose.msra.mxu0 %v67
    %123 = vmatprep.subr.mxu0 0.0
    %124 = vmatpush1.xpose.msra.mxu0 %v68
    %125 = vmatprep.subr.mxu0 0.0
    %126 = vmatpush1.xpose.msra.mxu0 %v69
    %127 = vmatprep.subr.mxu0 0.0
    %128 = vmatpush1.xpose.msra.mxu0 %v70
    %129 = vmatprep.subr.mxu0 0.0
    %130 = vmatpush1.xpose.msra.mxu0 %v71
    %131 = vmatprep.subr.mxu0 0.0
    %132 = vmatpush1.xpose.msra.mxu0 %v72
    %133 = vmatprep.subr.mxu0 0.0
    %134 = vmatpush1.xpose.msra.mxu0 %v73
    %135 = vmatprep.subr.mxu0 0.0
    %136 = vmatpush1.xpose.msra.mxu0 %v74
    %137 = vmatprep.subr.mxu0 0.0
    %138 = vmatpush1.xpose.msra.mxu0 %v75
    %139 = vmatprep.subr.mxu0 0.0
    %140 = vmatpush1.xpose.msra.mxu0 %v76
    %141 = vmatprep.mubr.f32.mxu0 0.0
    %142 = vmatmul.mubr.f32.gmra.mrb[0].mxu0 %v43
    %v143 = vpop.f32.mrb[0].mxu0
    %v144 = vadd.f32 0.0, %v143
    %v145 = vpop.f32.mrb[0].mxu0
    %v146 = vadd.f32 0.0, %v145
    %147 = vmatprep.mubr.f32.mxu0 0.0
    %148 = vmatmul.mubr.f32.gmra.mrb[0].mxu0 %v44
    %v149 = vpop.f32.mrb[0].mxu0
    %v150 = vadd.f32 0.0, %v149
    %v151 = vpop.f32.mrb[0].mxu0
    %v152 = vadd.f32 0.0, %v151
    %153 = vdwg.mxu0
    %v154 = vxor.u32 %v144, 2147483648
    %v155 = vxor.u32 %v146, 2147483648
    %v156 = vxor.u32 %v150, 2147483648
    %v157 = vxor.u32 %v152, 2147483648
    %v158 = vmul.f32 %v154, 1.442695
    %v159 = vpow.pop %v158
    %v160 = vmul.f32 %v155, 1.442695
    %v161 = vpow.pop %v160
    %v162 = vmul.f32 %v156, 1.442695
    %v163 = vpow.pop %v162
    %v164 = vmul.f32 %v157, 1.442695
    %v165 = vpow.pop %v164
    %v166 = vadd.f32 %v159, 1.0
    %v167 = vadd.f32 %v161, 1.0
    %v168 = vadd.f32 %v163, 1.0
    %v169 = vadd.f32 %v165, 1.0
    %v170 = vrcp.pop %v166
    %v171 = vmul.f32 1.0, %v170
    %v172 = vrcp.pop %v167
    %v173 = vmul.f32 1.0, %v172
    %v174 = vrcp.pop %v168
    %v175 = vmul.f32 1.0, %v174
    %v176 = vrcp.pop %v169
    %v177 = vmul.f32 1.0, %v176
    %v178 = vmul.f32 %v144, %v171
    %v179 = vmul.f32 %v146, %v173
    %v180 = vmul.f32 %v150, %v175
    %v181 = vmul.f32 %v152, %v177
    %v182 = vld [vmem:[%s2] sm:$0x1]
    %vm183 = vcmask 130048
    %v185 = vsel %vm183, %v182, 0
    %187 = vmatprep.subr.mxu0 %v179
    %188 = vmatpush1.msra.mxu0 %v178
    %189 = vmatprep.subr.mxu0 %v181
    %190 = vmatpush1.msra.mxu0 %v180
    %191 = vmatprep.subr.mxu0 0.0
    %192 = vmatpush1.msra.mxu0 0.0
    %193 = vmatprep.subr.mxu0 0.0
    %194 = vmatpush1.msra.mxu0 0.0
    %195 = vmatprep.subr.mxu0 0.0
    %196 = vmatpush1.msra.mxu0 0.0
    %197 = vmatprep.subr.mxu0 0.0
    %198 = vmatpush1.msra.mxu0 0.0
    %199 = vmatprep.subr.mxu0 0.0
    %200 = vmatpush1.msra.mxu0 0.0
    %201 = vmatprep.subr.mxu0 0.0
    %202 = vmatpush1.msra.mxu0 0.0
    %203 = vmatprep.subr.mxu0 0.0
    %204 = vmatpush1.msra.mxu0 0.0
    %205 = vmatprep.subr.mxu0 0.0
    %206 = vmatpush1.msra.mxu0 0.0
    %207 = vmatprep.subr.mxu0 0.0
    %208 = vmatpush1.msra.mxu0 0.0
    %209 = vmatprep.subr.mxu0 0.0
    %210 = vmatpush1.msra.mxu0 0.0
    %211 = vmatprep.subr.mxu0 0.0
    %212 = vmatpush1.msra.mxu0 0.0
    %213 = vmatprep.subr.mxu0 0.0
    %214 = vmatpush1.msra.mxu0 0.0
    %215 = vmatprep.subr.mxu0 0.0
    %216 = vmatpush1.msra.mxu0 0.0
    %217 = vmatprep.subr.mxu0 0.0
    %218 = vmatpush1.msra.mxu0 0.0
    %219 = vmatprep.subr.mxu0 0.0
    %220 = vmatpush1.msra.mxu0 0.0
    %221 = vmatprep.subr.mxu0 0.0
    %222 = vmatpush1.msra.mxu0 0.0
    %223 = vmatprep.subr.mxu0 0.0
    %224 = vmatpush1.msra.mxu0 0.0
    %225 = vmatprep.subr.mxu0 0.0
    %226 = vmatpush1.msra.mxu0 0.0
    %227 = vmatprep.subr.mxu0 0.0
    %228 = vmatpush1.msra.mxu0 0.0
    %229 = vmatprep.subr.mxu0 0.0
    %230 = vmatpush1.msra.mxu0 0.0
    %231 = vmatprep.subr.mxu0 0.0
    %232 = vmatpush1.msra.mxu0 0.0
    %233 = vmatprep.subr.mxu0 0.0
    %234 = vmatpush1.msra.mxu0 0.0
    %235 = vmatprep.subr.mxu0 0.0
    %236 = vmatpush1.msra.mxu0 0.0
    %237 = vmatprep.subr.mxu0 0.0
    %238 = vmatpush1.msra.mxu0 0.0
    %239 = vmatprep.subr.mxu0 0.0
    %240 = vmatpush1.msra.mxu0 0.0
    %241 = vmatprep.subr.mxu0 0.0
    %242 = vmatpush1.msra.mxu0 0.0
    %243 = vmatprep.subr.mxu0 0.0
    %244 = vmatpush1.msra.mxu0 0.0
    %245 = vmatprep.subr.mxu0 0.0
    %246 = vmatpush1.msra.mxu0 0.0
    %247 = vmatprep.subr.mxu0 0.0
    %248 = vmatpush1.msra.mxu0 0.0
    %249 = vmatprep.subr.mxu0 0.0
    %250 = vmatpush1.msra.mxu0 0.0
    %251 = vmatprep.mubr.f32.mxu0 0.0
    %252 = vmatmul.mubr.f32.gmra.mrb[0].mxu0 %v185
    %v253 = vpop.f32.mrb[0].mxu0
    %v254 = vadd.f32 0.0, %v253
    %v255 = vpop.f32.mrb[0].mxu0
    %v256 = vadd.f32 0.0, %v255
    %257 = vdwg.mxu0
    %v260 = vcombine.low %v254, %v256
    %v262 = vunpack.c.l.s4 1966171168
    %v263 = vunpack.c.0.s8 %v262
    %v264 = vlaneseq
    %v265 = vshrl.u32 %v264, 7
    %v266 = vsub.s32 %v263, %v265
    %v267 = vrot.slane %v260, %v266
    %v269 = vunpack.c.l.s4 1966171168
    %v270 = vunpack.c.0.s8 %v269
    %v271 = vlaneseq
    %v272 = vshrl.u32 %v271, 7
    %v273 = vsub.s32 %v270, %v272
    %v274 = vrot.slane %v267, %v273
    %v276 = vlaneseq
    %vm277 = vcmp.ge.s32.totalorder %v276, 0
    %vm278 = vcmp.lt.s32.totalorder %v276, 256
    %vm279 = vmand %vm277, %vm278
    %280 = vst.msk [vmem:[#allocation7] sm:$0x3] %vm279, %v274
    // Predicated region
    $region22: #{_lambda_.1} parent=1 // pred_check
      _
    $region23: #{_lambda_.1} parent=1 // pred_check_branch
      %282 = sbr.rel (0) target = $region25
    $region24: #{_lambda_.1} parent=1 // pred_region
      %s284 = ssub.s32 32, 32
      %285 = vsyncadd [#allocation4], %s284
      %s287 = sshll.u32 [#allocation7], 4
      %s288 = int_to_ptr.vmem [resolvable:$true] %s287
      %290 = dma.vmem_to_hbm [thread:$0]  %s288, 32, %s3, [#allocation4]
    $region25: #{_lambda_.1} parent=1 // pred_fallthru
      _
    // Predicated region
    $region26: #{_lambda_.1} parent=1 // pred_check
      _
    $region27: #{_lambda_.1} parent=1 // pred_check_branch
      %292 = sbr.rel (0) target = $region29
    $region28: #{_lambda_.1} parent=1 // pred_region
      %293 = dma.done [#allocation4], 32
    $region29: #{_lambda_.1} parent=1 // pred_fallthru
      _
    %294 = vsyncpa [#allocation3], 1
    %295 = vsyncpa [#allocation6], 1
    %296 = vsyncpa [#allocation4], 1

</llo_original>
